<compile_context>
chip_gen: v6e
topology: v6e:2x2x1
jax: 0.10.0
libtpu: 0.0.40
codegen_flags: <defaults>
</compile_context>

<pallas_src>
import functools

import jax
import jax.numpy as jnp
from jax.experimental import pallas as pl
from jax.experimental.pallas import tpu as pltpu


def _device_kind() -> str:
    try:
        return jax.devices()[0].device_kind.lower()
    except Exception:
        return ""


_KIND = _device_kind()
_IS_V5E = ("v5 lite" in _KIND) or ("v5e" in _KIND) or ("v5litepod" in _KIND)
_IS_V7 = "v7" in _KIND

_SMALL_BYTES = 256 * 1024  # below this, XLA's fused elementwise is cheaper


def _default_tile_bytes() -> int:
    if _IS_V7:
        return 8 * 1024 * 1024   # amortize ~0.35us/step against 3.2 TB/s HBM
    if _IS_V5E:
        return 2 * 1024 * 1024   # stay inside v5e's 16 MiB scoped-VMEM default
    return 4 * 1024 * 1024       # v6e and others


def _vmem_limit_bytes(tile_bytes: int):
    # in + out, double-buffered, plus headroom.  Only override when the scoped
    # default would be exceeded; keep headroom below physical VMEM (64 MiB v7x).
    needed = 4 * tile_bytes + (8 << 20)
    default = (16 << 20) if _IS_V5E else (32 << 20)
    if needed <= default:
        return None
    phys = (64 << 20) if _IS_V7 else (128 << 20)
    return min(needed, phys - (16 << 20))


def _sublane_multiple(dtype) -> int:
    # Sublane packing: 8 rows per vreg for 32-bit, 16 for 16-bit, 32 for 8-bit.
    itemsize = jnp.dtype(dtype).itemsize
    return {4: 8, 2: 16, 1: 32}.get(itemsize, 8)


def _compute_dtype(dtype):
    dt = jnp.dtype(dtype)
    if dt == jnp.dtype(jnp.float32):
        return jnp.float32
    if dt.itemsize == 2 and not _IS_V5E:
        return dtype            # bf16/f16 VPU on v6e/v7x: compute natively
    return jnp.float32          # v5e (no bf16 VALU) and everything else


def _round_up(a: int, b: int) -> int:
    return ((a + b - 1) // b) * b


def _hsigmoid_xla(x: jax.Array) -> jax.Array:
    return (jnp.clip(x + 3.0, 0.0, 6.0) / 6.0).astype(x.dtype)


def _hsigmoid_kernel(x_ref, o_ref, *, compute_dtype):
    x = x_ref[...].astype(compute_dtype)
    # relu6(x + 3) / 6  -> clamp to [0, 6] then scale
    y = jnp.clip(x + 3.0, 0.0, 6.0) * (1.0 / 6.0)
    o_ref[...] = y.astype(o_ref.dtype)


def _hsigmoid_2d(x2d: jax.Array, *, target_tile_bytes: int,
                 donate_input: bool) -> jax.Array:
    """Run the elementwise kernel over a lane-dense (rows, L) slab."""
    rows, lanes = x2d.shape
    itemsize = jnp.dtype(x2d.dtype).itemsize
    sub = _sublane_multiple(x2d.dtype)

    # ~target_tile_bytes per input block, rounded down to a sublane multiple.
    tile_rows = max(sub, (target_tile_bytes // (lanes * itemsize) // sub) * sub)
    if tile_rows >= rows:
        if rows >= 2 * sub:
            # Never emit a single-step grid for medium slabs: >=2 "parallel"
            # steps keeps both v7x TensorCores busy and overlaps in/out DMA.
            tile_rows = _round_up(pl.cdiv(rows, 2), sub)
        else:
            tile_rows = rows  # tiny slab: one full-extent block

    grid = (pl.cdiv(rows, tile_rows),)
    tile_bytes = tile_rows * lanes * itemsize
    vmem_limit = _vmem_limit_bytes(tile_bytes)

    kernel = functools.partial(_hsigmoid_kernel,
                               compute_dtype=_compute_dtype(x2d.dtype))

    return pl.pallas_call(
        kernel,
        out_shape=jax.ShapeDtypeStruct((rows, lanes), x2d.dtype),
        grid_spec=pltpu.PrefetchScalarGridSpec(
            num_scalar_prefetch=0,
            grid=grid,
            in_specs=[pl.BlockSpec((tile_rows, lanes), lambda i: (i, 0))],
            out_specs=pl.BlockSpec((tile_rows, lanes), lambda i: (i, 0)),
        ),
        compiler_params=pltpu.CompilerParams(
            dimension_semantics=("parallel",),
            vmem_limit_bytes=vmem_limit,
        ),
        input_output_aliases=({0: 0} if donate_input else {}),
    )(x2d)


def hsigmoid(x: jax.Array, *, target_tile_bytes: int | None = None,
             donate_input: bool = False, force_pallas: bool = False) -> jax.Array:
    """Elementwise hard-sigmoid. Accepts any shape; returns same shape/dtype."""
    orig_shape = x.shape
    n = x.size
    if n == 0:
        return x
    itemsize = jnp.dtype(x.dtype).itemsize

    # Tiny activations: kernel dispatch + pipeline warmup dominates -> XLA.
    if not force_pallas and n * itemsize < _SMALL_BYTES:
        return _hsigmoid_xla(x)

    # Fast path requires a free (contiguous) reshape to a lane-dense slab.
    lane_width = None
    for cand in (4096, 2048, 1024, 512, 256, 128):
        if n % cand == 0:
            lane_width = cand
            break

    # Ragged n: pad + slice would triple HBM traffic around a mem-bound op;
    # the fused XLA elementwise is roofline-optimal here.
    if lane_width is None:
        return _hsigmoid_xla(x)

    if target_tile_bytes is None:
        target_tile_bytes = _default_tile_bytes()

    rows = n // lane_width
    x2d = x.reshape(rows, lane_width)  # contiguous reshape: no HBM copy
    out2d = _hsigmoid_2d(x2d, target_tile_bytes=target_tile_bytes,
                         donate_input=donate_input)
    return out2d.reshape(orig_shape)


if __name__ == "__main__":
    key = jax.random.PRNGKey(0)

    def ref_fn(x):
        return (jnp.clip(x.astype(jnp.float32) + 3.0, 0.0, 6.0) / 6.0
                ).astype(x.dtype)

    # 1) Small NCHW input (XLA escape hatch) + forced-Pallas run of the kernel.
    x = jax.random.normal(key, (2, 4, 16, 16), dtype=jnp.float32) * 4.0
    out = jax.block_until_ready(hsigmoid(x))
    out_p = jax.block_until_ready(hsigmoid(x, force_pallas=True))
    r = ref_fn(x)
    assert out.shape == x.shape and out.dtype == x.dtype
    assert jnp.allclose(out, r, atol=1e-6, rtol=1e-6)
    assert jnp.allclose(out_p, r, atol=1e-6, rtol=1e-6)

    # 2) Ragged shape (n % 128 != 0) -> XLA fallback, same semantics.
    x2 = jax.random.normal(jax.random.PRNGKey(1), (2, 3, 5, 7),
                           dtype=jnp.float32) * 4.0
    out2 = jax.block_until_ready(hsigmoid(x2))
    assert out2.shape == x2.shape and out2.dtype == x2.dtype
    assert jnp.allclose(out2, ref_fn(x2), atol=1e-6, rtol=1e-6)

    # 3) bf16 activations, above the small-size threshold -> Pallas kernel
    #    (native bf16 compute on v6e/v7x, f32 upcast on v5e).
    x3 = (jax.random.normal(jax.random.PRNGKey(2), (8, 32, 32, 32),
                            dtype=jnp.float32) * 4.0).astype(jnp.bfloat16)
    out3 = jax.block_until_ready(hsigmoid(x3))
    assert out3.shape == x3.shape and out3.dtype == x3.dtype
    assert jnp.allclose(out3.astype(jnp.float32),
                        ref_fn(x3).astype(jnp.float32), atol=2e-2, rtol=2e-2)

    # 4) f32 slab above the threshold -> Pallas kernel, >=2 grid steps.
    x4 = jax.random.normal(jax.random.PRNGKey(3), (2, 64, 32, 32),
                           dtype=jnp.float32) * 4.0
    out4 = jax.block_until_ready(hsigmoid(x4))
    assert out4.shape == x4.shape and out4.dtype == x4.dtype
    assert jnp.allclose(out4, ref_fn(x4), atol=1e-6, rtol=1e-6)

    print("KERNEL_OK")
</pallas_src>

<mosaic_0001>
module attributes {stable_mosaic.version = 11 : i64} {
  func.func @_hsigmoid_kernel(%arg0: i32, %arg1: memref<1x2048xf32, #tpu.memory_space<vmem>>, %arg2: memref<1x2048xf32, #tpu.memory_space<vmem>>) attributes {dimension_semantics = [#tpu.dimension_semantics<parallel>], iteration_bounds = array<i64: 1>, scalar_prefetch = 0 : i64, scratch_operands = 0 : i64, tpu.core_type = #tpu.core_type<tc>, window_params = [{transform_indices = @transform_0, window_bounds = array<i64: 1, 2048>}, {transform_indices = @transform_1, window_bounds = array<i64: 1, 2048>}]} {
    %c0 = arith.constant 0 : index
    %c0_0 = arith.constant 0 : index
    %0 = vector.load %arg1[%c0, %c0_0] : memref<1x2048xf32, #tpu.memory_space<vmem>>, vector<1x2048xf32>
    %cst = arith.constant 3.000000e+00 : f32
    %1 = vector.broadcast %cst : f32 to vector<1x2048xf32>
    %2 = arith.addf %0, %1 : vector<1x2048xf32>
    %cst_1 = arith.constant 0.000000e+00 : f32
    %cst_2 = arith.constant 6.000000e+00 : f32
    %3 = vector.broadcast %cst_1 : f32 to vector<1x2048xf32>
    %4 = arith.maximumf %3, %2 : vector<1x2048xf32>
    %5 = vector.broadcast %cst_2 : f32 to vector<1x2048xf32>
    %6 = arith.minimumf %5, %4 : vector<1x2048xf32>
    %cst_3 = arith.constant 0.166666672 : f32
    %7 = vector.broadcast %cst_3 : f32 to vector<1x2048xf32>
    %8 = arith.mulf %6, %7 : vector<1x2048xf32>
    %c0_4 = arith.constant 0 : index
    %c0_5 = arith.constant 0 : index
    %9 = vector.load %arg2[%c0_4, %c0_5] : memref<1x2048xf32, #tpu.memory_space<vmem>>, vector<1x2048xf32>
    tpu.vector_store %arg2[%c0_4, %c0_5], %8 {strides = array<i32>} : memref<1x2048xf32, #tpu.memory_space<vmem>>, vector<1x2048xf32>,
    return
  }
  func.func @transform_0(%arg0: i32) -> (i32, i32) {
    %c0_i32 = arith.constant 0 : i32
    %c0_i32_0 = arith.constant 0 : i32
    return %arg0, %c0_i32 : i32, i32
  }
  func.func @transform_1(%arg0: i32) -> (i32, i32) {
    %c0_i32 = arith.constant 0 : i32
    %c0_i32_0 = arith.constant 0 : i32
    return %arg0, %c0_i32 : i32, i32
  }
}

</mosaic_0001>

<llo_original>
// kernel: tpu_custom_call.1
$region0: #{tpu_custom_call.1}
  #allocation0 [shape = 'u32[]', space=smem, size = 0x4, offset = 0x4, fixed_abs, tag = 'smem constant byte address 0x4 - core index']
  #allocation1 [shape = 'u32[144,128]{1,0:T(1,128)}', space=vmem, size = 0x12000, scoped, tag = 'internal scratch']
  %s0 = inlined_call_operand.hbm [shape: f32[1,2048], index: 0, kind: input, shape index: {}]
  %s1 = inlined_call_operand.hbm [shape: f32[1,2048], index: 1, kind: output, shape index: {}]
  %s2 = sld [smem:[#allocation0]]
  $region18: #{tpu_custom_call.1} parent=0
    _
  %s4 = ssub.s32 1, %s2
  %s5 = scalar_select 0, %s4, %s2
  $region1: #{tpu_custom_call.1} parent=0
    #allocation2 [shape = 'u8[8192]{0}', space=vmem, size = 0x2000, scoped, tag = 'input window, operand 0, single buffered']
    #allocation3 [shape = 's32[1]{0}', space=sflag, size = 0x4, scoped, tag = 'scoped memory for tpu_custom_call.1']
    #allocation4 [shape = 's32[1]{0}', space=sflag, size = 0x4, scoped, tag = 'scoped memory for tpu_custom_call.1']
    #allocation5 [shape = 'u8[8192]{0}', space=vmem, size = 0x2000, scoped, tag = 'output window, operand 0, single buffered']
    %6 = vsyncpa [#allocation3], 0
    %7 = vsyncpa [#allocation4], 0
    // Predicated region
    $region2: #{tpu_custom_call.1} parent=1 // pred_check
      _
    $region3: #{tpu_custom_call.1} parent=1 // pred_check_branch
      %9 = sbr.rel (0) target = $region5
    $region4: #{tpu_custom_call.1} parent=1 // pred_region
      %s11 = ssub.s32 256, 256
      %12 = vsyncadd [#allocation3], %s11
      %s14 = sshll.u32 [#allocation2], 4
      %s15 = int_to_ptr.vmem [resolvable:$true] %s14
      %17 = dma.hbm_to_vmem [thread:$0]  %s0, 256, %s15, [#allocation3]
    $region5: #{tpu_custom_call.1} parent=1 // pred_fallthru
      _
    // Predicated region
    $region6: #{tpu_custom_call.1} parent=1 // pred_check
      _
    $region7: #{tpu_custom_call.1} parent=1 // pred_check_branch
      %19 = sbr.rel (0) target = $region9
    $region8: #{tpu_custom_call.1} parent=1 // pred_region
      %20 = dma.done [#allocation3], 256
    $region9: #{tpu_custom_call.1} parent=1 // pred_fallthru
      _
    %v21 = vld [vmem:[#allocation2] sm:$0xff]
    %v22 = vld [vmem:[#allocation2 + $0x8] sm:$0xff]
    %v23 = vadd.f32 %v21, 3.0
    %v24 = vadd.f32 %v22, 3.0
    %v25 = vmax.f32 %v23, 0.0
    %v26 = vmax.f32 %v24, 0.0
    %v27 = vmin.f32 %v25, 6.0
    %v28 = vmin.f32 %v26, 6.0
    %v29 = vmul.f32 %v27, 0.16666667
    %v30 = vmul.f32 %v28, 0.16666667
    %31 = vst [vmem:[#allocation5] sm:$0xff] %v29
    %32 = vst [vmem:[#allocation5 + $0x8] sm:$0xff] %v30
    // Predicated region
    $region10: #{tpu_custom_call.1} parent=1 // pred_check
      _
    $region11: #{tpu_custom_call.1} parent=1 // pred_check_branch
      %34 = sbr.rel (0) target = $region13
    $region12: #{tpu_custom_call.1} parent=1 // pred_region
      %s36 = ssub.s32 256, 256
      %37 = vsyncadd [#allocation4], %s36
      %s39 = sshll.u32 [#allocation5], 4
      %s40 = int_to_ptr.vmem [resolvable:$true] %s39
      %42 = dma.vmem_to_hbm [thread:$0]  %s40, 256, %s1, [#allocation4]
    $region13: #{tpu_custom_call.1} parent=1 // pred_fallthru
      _
    // Predicated region
    $region14: #{tpu_custom_call.1} parent=1 // pred_check
      _
    $region15: #{tpu_custom_call.1} parent=1 // pred_check_branch
      %44 = sbr.rel (0) target = $region17
    $region16: #{tpu_custom_call.1} parent=1 // pred_region
      %45 = dma.done [#allocation4], 256
    $region17: #{tpu_custom_call.1} parent=1 // pred_fallthru
      _
    %46 = vsyncpa [#allocation3], 1
    %47 = vsyncpa [#allocation4], 1

</llo_original>
